<compile_context>
chip_gen: v7x
topology: tpu7x:2x2x1
jax: 0.10.0
libtpu: 0.0.40
codegen_flags: <defaults>
</compile_context>

<pallas_src>
import jax
import jax.numpy as jnp
from jax import lax
from jax.experimental import pallas as pl
from jax.experimental.pallas import tpu as pltpu

EPS = 1e-5


# ---------------------------------------------------------------------------
# Kernel: one grid step == one ResidualBlock applied to the resident activation
# ---------------------------------------------------------------------------
def residual_stack_kernel(x_ref, w1t_ref, w2t_ref, p_ref, o_ref, act_ref):
    """x_ref:   (B, D) f32   input activation (fetched once, index_map const)
       w1t_ref: (1, D, D) bf16  pre-transposed Linear1 weight for this block
       w2t_ref: (1, D, D) bf16  pre-transposed Linear2 weight for this block
       p_ref:   (1, 4, D) f32   packed BN params [gamma1; beta1; gamma2; beta2]
       o_ref:   (B, D)      output (written back to HBM only after last step)
       act_ref: (B, D) f32  VMEM-resident activation carried across blocks."""
    l = pl.program_id(0)

    @pl.when(l == 0)
    def _():
        act_ref[...] = x_ref[...].astype(jnp.float32)

    p = p_ref[0]                                   # (4, D)
    g1, be1 = p[0:1, :], p[1:2, :]
    g2, be2 = p[2:3, :], p[3:4, :]

    def bn_fold(h, g, be):
        # Training-mode BN, two-pass biased variance (robust to non-zero-mean
        # post-ReLU activations), folded into one scale + shift.
        m = jnp.mean(h, axis=0, keepdims=True)
        c = h - m
        var = jnp.mean(c * c, axis=0, keepdims=True)
        return c * (g * lax.rsqrt(var + EPS)) + be   # rsqrt -> EUP slot (free)

    # ---- linear1 (bias cancelled by bn1): bf16 MXU operands, f32 accumulate.
    # Cast immediately so the f32 activation is not live across both matmuls.
    h = jnp.dot(act_ref[...].astype(jnp.bfloat16), w1t_ref[0],
                preferred_element_type=jnp.float32)
    # ---- bn1 + ReLU (f32)
    h = jnp.maximum(bn_fold(h, g1, be1), 0.0)
    # ---- linear2 (bias cancelled by bn2)
    h = jnp.dot(h.astype(jnp.bfloat16), w2t_ref[0],
                preferred_element_type=jnp.float32)
    # ---- bn2 + residual add (re-read the f32 residual from VMEM) + ReLU
    act_ref[...] = jnp.maximum(bn_fold(h, g2, be2) + act_ref[...], 0.0)

    @pl.when(l == pl.num_programs(0) - 1)
    def _():
        o_ref[...] = act_ref[...].astype(o_ref.dtype)


# ---------------------------------------------------------------------------
# Host wrappers
# ---------------------------------------------------------------------------
def prepare_params(layers):
    """One-time parameter preparation (hoisted out of the per-call path).

    layers: list of tuples (w1, b1, g1, be1, w2, b2, g2, be2) per block.
    Linear biases are intentionally dropped: training-mode BatchNorm's mean
    subtraction cancels them exactly.  Weights are pre-transposed and cast to
    bf16 (native MXU input dtype); per-feature BN params are packed so each
    block needs a single small DMA."""
    w1t = jnp.stack([l[0].T for l in layers]).astype(jnp.bfloat16)   # (L, D, D)
    w2t = jnp.stack([l[4].T for l in layers]).astype(jnp.bfloat16)   # (L, D, D)
    bn = jnp.stack([jnp.stack([l[2], l[3], l[6], l[7]]) for l in layers]
                   ).astype(jnp.float32)                              # (L, 4, D)
    return w1t, w2t, bn


def residual_block_stack(x, w1t, w2t, bn_params):
    """Apply L fused ResidualBlocks (L = w1t.shape[0]) in one pallas_call."""
    B, D = x.shape
    L = w1t.shape[0]

    bytes_accessed = int(
        x.size * x.dtype.itemsize          # x read (once)
        + B * D * x.dtype.itemsize         # output write (once)
        + w1t.size * w1t.dtype.itemsize
        + w2t.size * w2t.dtype.itemsize
        + bn_params.size * bn_params.dtype.itemsize)

    return pl.pallas_call(
        residual_stack_kernel,
        out_shape=jax.ShapeDtypeStruct((B, D), x.dtype),
        grid=(L,),
        in_specs=[
            pl.BlockSpec((B, D), lambda l: (0, 0)),        # x: fetched once
            pl.BlockSpec((1, D, D), lambda l: (l, 0, 0)),  # w1t per block
            pl.BlockSpec((1, D, D), lambda l: (l, 0, 0)),  # w2t per block
            pl.BlockSpec((1, 4, D), lambda l: (l, 0, 0)),  # BN params per block
        ],
        out_specs=pl.BlockSpec((B, D), lambda l: (0, 0)),  # written once at end
        scratch_shapes=[pltpu.VMEM((B, D), jnp.float32)],  # resident activation
        input_output_aliases={0: 0},                       # reuse x's HBM buffer
        cost_estimate=pl.CostEstimate(
            flops=4 * L * B * D * D, transcendentals=0,
            bytes_accessed=bytes_accessed),
        compiler_params=pltpu.CompilerParams(
            dimension_semantics=("arbitrary",)),           # carried L axis
    )(x, w1t, w2t, bn_params)


# ---------------------------------------------------------------------------
# References
# ---------------------------------------------------------------------------
def reference_module_stack(x, layers):
    """Faithful f32 PyTorch forward (with biases, centered variance)."""
    def bn(h, g, be):
        m = jnp.mean(h, axis=0, keepdims=True)
        v = jnp.mean((h - m) ** 2, axis=0, keepdims=True)
        return (h - m) * lax.rsqrt(v + EPS) * g + be

    h = x
    for (w1, b1, g1, be1, w2, b2, g2, be2) in layers:
        r = h
        h = h @ w1.T + b1
        h = jnp.maximum(bn(h, g1, be1), 0.0)
        h = h @ w2.T + b2
        h = jnp.maximum(bn(h, g2, be2) + r, 0.0)
    return h


def reference_precision_stack(x, w1t, w2t, bn_params):
    """Plain-JAX mirror of the kernel's exact precision recipe (tight check)."""
    def bn_fold(h, g, be):
        m = jnp.mean(h, axis=0, keepdims=True)
        c = h - m
        v = jnp.mean(c * c, axis=0, keepdims=True)
        return c * (g * lax.rsqrt(v + EPS)) + be

    h = x
    for l in range(w1t.shape[0]):
        r = h
        p = bn_params[l]
        t = jnp.dot(h.astype(jnp.bfloat16), w1t[l],
                    preferred_element_type=jnp.float32)
        t = jnp.maximum(bn_fold(t, p[0:1, :], p[1:2, :]), 0.0)
        t = jnp.dot(t.astype(jnp.bfloat16), w2t[l],
                    preferred_element_type=jnp.float32)
        h = jnp.maximum(bn_fold(t, p[2:3, :], p[3:4, :]) + r, 0.0)
    return h


# ---------------------------------------------------------------------------
if __name__ == "__main__":
    # B=256 fills the MXU LHS-row dimension (128 rows/pass on v5e, 256 on
    # v6e/v7x) while the full working set (< 1.5 MiB) stays VMEM-resident.
    B, D, L = 256, 128, 3

    key = jax.random.PRNGKey(0)
    kx, kp = jax.random.split(key)
    x = jax.random.normal(kx, (B, D), jnp.float32)

    bound = 1.0 / (D ** 0.5)
    layers = []
    for lkey in jax.random.split(kp, L):
        k1, k2, k3, k4, k5, k6, k7, k8 = jax.random.split(lkey, 8)
        w1 = jax.random.uniform(k1, (D, D), jnp.float32, -bound, bound)
        b1 = jax.random.uniform(k2, (D,), jnp.float32, -bound, bound)
        w2 = jax.random.uniform(k3, (D, D), jnp.float32, -bound, bound)
        b2 = jax.random.uniform(k4, (D,), jnp.float32, -bound, bound)
        # BatchNorm affine params (perturbed from default init to exercise them)
        g1 = 1.0 + 0.1 * jax.random.normal(k5, (D,), jnp.float32)
        be1 = 0.1 * jax.random.normal(k6, (D,), jnp.float32)
        g2 = 1.0 + 0.1 * jax.random.normal(k7, (D,), jnp.float32)
        be2 = 0.1 * jax.random.normal(k8, (D,), jnp.float32)
        layers.append((w1, b1, g1, be1, w2, b2, g2, be2))

    forward = jax.jit(residual_block_stack)

    # ---- single block (L=1): exactly the original ResidualBlock module -----
    w1t_1, w2t_1, bn_1 = prepare_params(layers[:1])
    out1 = jax.block_until_ready(forward(x, w1t_1, w2t_1, bn_1))
    assert out1.shape == (B, D)
    ref1_p = reference_precision_stack(x, w1t_1, w2t_1, bn_1)
    assert jnp.allclose(out1, ref1_p, rtol=1e-3, atol=2e-3), \
        "L=1 mismatch vs precision-matched reference"
    ref1_m = reference_module_stack(x, layers[:1])
    assert jnp.allclose(out1, ref1_m, rtol=5e-2, atol=5e-2), \
        "L=1 mismatch vs f32 module-semantics reference"

    # ---- fused stack (L=3): one launch, activation resident in VMEM --------
    w1t, w2t, bn = prepare_params(layers)
    out3 = jax.block_until_ready(forward(x, w1t, w2t, bn))
    assert out3.shape == (B, D)
    ref3_p = reference_precision_stack(x, w1t, w2t, bn)
    assert jnp.allclose(out3, ref3_p, rtol=1e-3, atol=3e-3), \
        "L=3 mismatch vs precision-matched reference"
    ref3_m = reference_module_stack(x, layers)
    assert jnp.allclose(out3, ref3_m, rtol=5e-2, atol=5e-2), \
        "L=3 mismatch vs f32 module-semantics reference"

    print("KERNEL_OK")
</pallas_src>

<mosaic_0001>
module attributes {stable_mosaic.version = 11 : i64} {
  func.func @residual_stack_kernel(%arg0: i32, %arg1: memref<256x128xf32, #tpu.memory_space<vmem>>, %arg2: memref<1x128x128xbf16, #tpu.memory_space<vmem>>, %arg3: memref<1x128x128xbf16, #tpu.memory_space<vmem>>, %arg4: memref<1x4x128xf32, #tpu.memory_space<vmem>>, %arg5: memref<256x128xf32, #tpu.memory_space<vmem>>, %arg6: memref<256x128xf32, #tpu.memory_space<vmem>>) attributes {dimension_semantics = [#tpu.dimension_semantics<arbitrary>], iteration_bounds = array<i64: 1>, scalar_prefetch = 0 : i64, scratch_operands = 1 : i64, tpu.core_type = #tpu.core_type<tc>, window_params = [{pipeline_mode = #tpu.pipeline_mode<synchronous>, transform_indices = @transform_0, window_bounds = array<i64: 256, 128>}, {transform_indices = @transform_1, window_bounds = array<i64: 1, 128, 128>}, {transform_indices = @transform_2, window_bounds = array<i64: 1, 128, 128>}, {transform_indices = @transform_3, window_bounds = array<i64: 1, 4, 128>}, {pipeline_mode = #tpu.pipeline_mode<synchronous>, transform_indices = @transform_4, window_bounds = array<i64: 256, 128>}]} {
    %c0_i32 = arith.constant 0 : i32
    %0 = arith.cmpi eq, %arg0, %c0_i32 : i32
    %1 = arith.extui %0 : i1 to i32
    %c0_i32_0 = arith.constant 0 : i32
    %2 = arith.cmpi ne, %1, %c0_i32_0 : i32
    scf.if %2 {
      %c0_30 = arith.constant 0 : index
      %c0_31 = arith.constant 0 : index
      %66 = vector.load %arg1[%c0_30, %c0_31] : memref<256x128xf32, #tpu.memory_space<vmem>>, vector<256x128xf32>
      %c0_32 = arith.constant 0 : index
      %c0_33 = arith.constant 0 : index
      %67 = vector.load %arg6[%c0_32, %c0_33] : memref<256x128xf32, #tpu.memory_space<vmem>>, vector<256x128xf32>
      tpu.vector_store %arg6[%c0_32, %c0_33], %66 {strides = array<i32>} : memref<256x128xf32, #tpu.memory_space<vmem>>, vector<256x128xf32>,
    } else {
    }
    %c0 = arith.constant 0 : index
    %c0_1 = arith.constant 0 : index
    %c0_2 = arith.constant 0 : index
    %3 = vector.load %arg4[%c0, %c0_1, %c0_2] : memref<1x4x128xf32, #tpu.memory_space<vmem>>, vector<1x4x128xf32>
    %4 = vector.shape_cast %3 : vector<1x4x128xf32> to vector<4x128xf32>
    %5 = vector.extract_strided_slice %4 {offsets = [0, 0], sizes = [1, 128], strides = [1, 1]} : vector<4x128xf32> to vector<1x128xf32>
    %6 = vector.extract_strided_slice %4 {offsets = [1, 0], sizes = [1, 128], strides = [1, 1]} : vector<4x128xf32> to vector<1x128xf32>
    %7 = vector.extract_strided_slice %4 {offsets = [2, 0], sizes = [1, 128], strides = [1, 1]} : vector<4x128xf32> to vector<1x128xf32>
    %8 = vector.extract_strided_slice %4 {offsets = [3, 0], sizes = [1, 128], strides = [1, 1]} : vector<4x128xf32> to vector<1x128xf32>
    %c0_3 = arith.constant 0 : index
    %c0_4 = arith.constant 0 : index
    %9 = vector.load %arg6[%c0_3, %c0_4] : memref<256x128xf32, #tpu.memory_space<vmem>>, vector<256x128xf32>
    %10 = arith.truncf %9 : vector<256x128xf32> to vector<256x128xbf16>
    %c0_5 = arith.constant 0 : index
    %c0_6 = arith.constant 0 : index
    %c0_7 = arith.constant 0 : index
    %11 = vector.load %arg2[%c0_5, %c0_6, %c0_7] : memref<1x128x128xbf16, #tpu.memory_space<vmem>>, vector<1x128x128xbf16>
    %12 = vector.shape_cast %11 : vector<1x128x128xbf16> to vector<128x128xbf16>
    %cst = arith.constant dense<0.000000e+00> : vector<256x128xf32>
    %13 = tpu.matmul %10, %12, %cst {dimension_numbers = #tpu.dot_dimension_numbers<[1], [0], [0], [1], [0, 0, 1, 1], [], []>} : vector<256x128xbf16>, vector<128x128xbf16>, vector<256x128xf32> -> vector<256x128xf32>
    %cst_8 = arith.constant dense<0.000000e+00> : vector<128xf32>
    %14 = vector.multi_reduction <add>, %13, %cst_8 [0] : vector<256x128xf32> to vector<128xf32>
    %15 = vector.shape_cast %14 : vector<128xf32> to vector<1x128xf32>
    %cst_9 = arith.constant 2.560000e+02 : f32
    %16 = vector.broadcast %cst_9 : f32 to vector<1x128xf32>
    %17 = arith.divf %15, %16 : vector<1x128xf32>
    %18 = vector.broadcast %17 : vector<1x128xf32> to vector<256x128xf32>
    %19 = arith.subf %13, %18 : vector<256x128xf32>
    %20 = arith.mulf %19, %19 : vector<256x128xf32>
    %cst_10 = arith.constant dense<0.000000e+00> : vector<128xf32>
    %21 = vector.multi_reduction <add>, %20, %cst_10 [0] : vector<256x128xf32> to vector<128xf32>
    %22 = vector.shape_cast %21 : vector<128xf32> to vector<1x128xf32>
    %cst_11 = arith.constant 2.560000e+02 : f32
    %23 = vector.broadcast %cst_11 : f32 to vector<1x128xf32>
    %24 = arith.divf %22, %23 : vector<1x128xf32>
    %cst_12 = arith.constant 9.99999974E-6 : f32
    %25 = vector.broadcast %cst_12 : f32 to vector<1x128xf32>
    %26 = arith.addf %24, %25 : vector<1x128xf32>
    %27 = math.rsqrt %26 : vector<1x128xf32>
    %28 = arith.mulf %5, %27 : vector<1x128xf32>
    %29 = vector.broadcast %28 : vector<1x128xf32> to vector<256x128xf32>
    %30 = arith.mulf %19, %29 : vector<256x128xf32>
    %31 = vector.broadcast %6 : vector<1x128xf32> to vector<256x128xf32>
    %32 = arith.addf %30, %31 : vector<256x128xf32>
    %cst_13 = arith.constant 0.000000e+00 : f32
    %33 = vector.broadcast %cst_13 : f32 to vector<256x128xf32>
    %34 = arith.maximumf %32, %33 : vector<256x128xf32>
    %35 = arith.truncf %34 : vector<256x128xf32> to vector<256x128xbf16>
    %c0_14 = arith.constant 0 : index
    %c0_15 = arith.constant 0 : index
    %c0_16 = arith.constant 0 : index
    %36 = vector.load %arg3[%c0_14, %c0_15, %c0_16] : memref<1x128x128xbf16, #tpu.memory_space<vmem>>, vector<1x128x128xbf16>
    %37 = vector.shape_cast %36 : vector<1x128x128xbf16> to vector<128x128xbf16>
    %cst_17 = arith.constant dense<0.000000e+00> : vector<256x128xf32>
    %38 = tpu.matmul %35, %37, %cst_17 {dimension_numbers = #tpu.dot_dimension_numbers<[1], [0], [0], [1], [0, 0, 1, 1], [], []>} : vector<256x128xbf16>, vector<128x128xbf16>, vector<256x128xf32> -> vector<256x128xf32>
    %cst_18 = arith.constant dense<0.000000e+00> : vector<128xf32>
    %39 = vector.multi_reduction <add>, %38, %cst_18 [0] : vector<256x128xf32> to vector<128xf32>
    %40 = vector.shape_cast %39 : vector<128xf32> to vector<1x128xf32>
    %cst_19 = arith.constant 2.560000e+02 : f32
    %41 = vector.broadcast %cst_19 : f32 to vector<1x128xf32>
    %42 = arith.divf %40, %41 : vector<1x128xf32>
    %43 = vector.broadcast %42 : vector<1x128xf32> to vector<256x128xf32>
    %44 = arith.subf %38, %43 : vector<256x128xf32>
    %45 = arith.mulf %44, %44 : vector<256x128xf32>
    %cst_20 = arith.constant dense<0.000000e+00> : vector<128xf32>
    %46 = vector.multi_reduction <add>, %45, %cst_20 [0] : vector<256x128xf32> to vector<128xf32>
    %47 = vector.shape_cast %46 : vector<128xf32> to vector<1x128xf32>
    %cst_21 = arith.constant 2.560000e+02 : f32
    %48 = vector.broadcast %cst_21 : f32 to vector<1x128xf32>
    %49 = arith.divf %47, %48 : vector<1x128xf32>
    %cst_22 = arith.constant 9.99999974E-6 : f32
    %50 = vector.broadcast %cst_22 : f32 to vector<1x128xf32>
    %51 = arith.addf %49, %50 : vector<1x128xf32>
    %52 = math.rsqrt %51 : vector<1x128xf32>
    %53 = arith.mulf %7, %52 : vector<1x128xf32>
    %54 = vector.broadcast %53 : vector<1x128xf32> to vector<256x128xf32>
    %55 = arith.mulf %44, %54 : vector<256x128xf32>
    %56 = vector.broadcast %8 : vector<1x128xf32> to vector<256x128xf32>
    %57 = arith.addf %55, %56 : vector<256x128xf32>
    %c0_23 = arith.constant 0 : index
    %c0_24 = arith.constant 0 : index
    %58 = vector.load %arg6[%c0_23, %c0_24] : memref<256x128xf32, #tpu.memory_space<vmem>>, vector<256x128xf32>
    %59 = arith.addf %57, %58 : vector<256x128xf32>
    %cst_25 = arith.constant 0.000000e+00 : f32
    %60 = vector.broadcast %cst_25 : f32 to vector<256x128xf32>
    %61 = arith.maximumf %59, %60 : vector<256x128xf32>
    %c0_26 = arith.constant 0 : index
    %c0_27 = arith.constant 0 : index
    %62 = vector.load %arg6[%c0_26, %c0_27] : memref<256x128xf32, #tpu.memory_space<vmem>>, vector<256x128xf32>
    tpu.vector_store %arg6[%c0_26, %c0_27], %61 {strides = array<i32>} : memref<256x128xf32, #tpu.memory_space<vmem>>, vector<256x128xf32>,
    %c0_i32_28 = arith.constant 0 : i32
    %63 = arith.cmpi eq, %arg0, %c0_i32_28 : i32
    %64 = arith.extui %63 : i1 to i32
    %c0_i32_29 = arith.constant 0 : i32
    %65 = arith.cmpi ne, %64, %c0_i32_29 : i32
    scf.if %65 {
      %c0_30 = arith.constant 0 : index
      %c0_31 = arith.constant 0 : index
      %66 = vector.load %arg6[%c0_30, %c0_31] : memref<256x128xf32, #tpu.memory_space<vmem>>, vector<256x128xf32>
      %c0_32 = arith.constant 0 : index
      %c0_33 = arith.constant 0 : index
      %67 = vector.load %arg5[%c0_32, %c0_33] : memref<256x128xf32, #tpu.memory_space<vmem>>, vector<256x128xf32>
      tpu.vector_store %arg5[%c0_32, %c0_33], %66 {strides = array<i32>} : memref<256x128xf32, #tpu.memory_space<vmem>>, vector<256x128xf32>,
    } else {
    }
    return
  }
  func.func @transform_0(%arg0: i32) -> (i32, i32) {
    %c0_i32 = arith.constant 0 : i32
    %c0_i32_0 = arith.constant 0 : i32
    %c0_i32_1 = arith.constant 0 : i32
    return %c0_i32, %c0_i32_0 : i32, i32
  }
  func.func @transform_1(%arg0: i32) -> (i32, i32, i32) {
    %c0_i32 = arith.constant 0 : i32
    %c0_i32_0 = arith.constant 0 : i32
    %c0_i32_1 = arith.constant 0 : i32
    return %arg0, %c0_i32, %c0_i32_0 : i32, i32, i32
  }
  func.func @transform_2(%arg0: i32) -> (i32, i32, i32) {
    %c0_i32 = arith.constant 0 : i32
    %c0_i32_0 = arith.constant 0 : i32
    %c0_i32_1 = arith.constant 0 : i32
    return %arg0, %c0_i32, %c0_i32_0 : i32, i32, i32
  }
  func.func @transform_3(%arg0: i32) -> (i32, i32, i32) {
    %c0_i32 = arith.constant 0 : i32
    %c0_i32_0 = arith.constant 0 : i32
    %c0_i32_1 = arith.constant 0 : i32
    return %arg0, %c0_i32, %c0_i32_0 : i32, i32, i32
  }
  func.func @transform_4(%arg0: i32) -> (i32, i32) {
    %c0_i32 = arith.constant 0 : i32
    %c0_i32_0 = arith.constant 0 : i32
    %c0_i32_1 = arith.constant 0 : i32
    return %c0_i32, %c0_i32_0 : i32, i32
  }
}

</mosaic_0001>

<llo_original>
// kernel: residual_block_stack.1
$region0: #{residual_block_stack.1}
  #allocation0 [shape = 'u32[]', space=smem, size = 0x4, offset = 0x4, fixed_abs, tag = 'smem constant byte address 0x4 - core index']
  #allocation1 [shape = 'u32[144,128]{1,0:T(1,128)}', space=vmem, size = 0x12000, scoped, tag = 'internal scratch']
  #allocation2 [shape = 'f32[256,128]{1,0:T(8,128)}', space=vmem, size = 0x20000, scoped, tag = 'scratch operand']
  %s0 = inlined_call_operand.hbm [shape: f32[256,128], index: 0, kind: input, shape index: {}, may-alias: {0,4}]
  %s1 = inlined_call_operand.vmem [shape: bf16[1,128,128], index: 1, kind: input, shape index: {}]
  %s2 = inlined_call_operand.vmem [shape: bf16[1,128,128], index: 2, kind: input, shape index: {}]
  %s3 = inlined_call_operand.vmem [shape: f32[1,4,128], index: 3, kind: input, shape index: {}]
  %s4 = inlined_call_operand.hbm [shape: f32[256,128], index: 4, kind: output, shape index: {}, may-alias: {0,4}]
  %s5 = sld [smem:[#allocation0]]
  $region38: #{residual_block_stack.1} parent=0
    _
  %s7 = ssub.s32 1, %s5
  %s8 = scalar_select 0, %s7, %s5
  $region1: #{residual_block_stack.1} parent=0
    #allocation3 [shape = 'u8[131072]{0}', space=vmem, size = 0x20000, scoped, tag = 'input window, operand 0, single buffered']
    #allocation4 [shape = 's32[1]{0}', space=sflag, size = 0x4, scoped, tag = 'scoped memory for residual_block_stack.1']
    #allocation5 [shape = 's32[1]{0}', space=sflag, size = 0x4, scoped, tag = 'scoped memory for residual_block_stack.1']
    #allocation6 [shape = 'u8[131072]{0}', space=vmem, size = 0x20000, scoped, tag = 'output window, operand 0, single buffered']
    %9 = vsyncpa [#allocation4], 0
    %10 = vsyncpa [#allocation5], 0
    // Predicated region
    $region2: #{residual_block_stack.1} parent=1 // pred_check
      _
    $region3: #{residual_block_stack.1} parent=1 // pred_check_branch
      %12 = sbr.rel (0) target = $region5
    $region4: #{residual_block_stack.1} parent=1 // pred_region
      %s14 = ssub.s32 4096, 4096
      %15 = vsyncadd [#allocation4], %s14
      %s16 = sshll.u32 [#allocation3], 4
      %s17 = int_to_ptr.vmem [resolvable:$true] %s16
      %22 = dma.hbm_to_vmem [thread:$0]  %s0, 4096, %s17, [#allocation4], 128, 128, 8
    $region5: #{residual_block_stack.1} parent=1 // pred_fallthru
      _
    // Predicated region
    $region6: #{residual_block_stack.1} parent=1 // pred_check
      _
    $region7: #{residual_block_stack.1} parent=1 // pred_check_branch
      %24 = sbr.rel (0) target = $region9
    $region8: #{residual_block_stack.1} parent=1 // pred_region
      _
    $region9: #{residual_block_stack.1} parent=1 // pred_fallthru
      _
    // Predicated region
    $region10: #{residual_block_stack.1} parent=1 // pred_check
      _
    $region11: #{residual_block_stack.1} parent=1 // pred_check_branch
      %26 = sbr.rel (0) target = $region13
    $region12: #{residual_block_stack.1} parent=1 // pred_region
      _
    $region13: #{residual_block_stack.1} parent=1 // pred_fallthru
      _
    // Predicated region
    $region14: #{residual_block_stack.1} parent=1 // pred_check
      _
    $region15: #{residual_block_stack.1} parent=1 // pred_check_branch
      %28 = sbr.rel (0) target = $region17
    $region16: #{residual_block_stack.1} parent=1 // pred_region
      _
    $region17: #{residual_block_stack.1} parent=1 // pred_fallthru
      _
    // Predicated region
    $region18: #{residual_block_stack.1} parent=1 // pred_check
      _
    $region19: #{residual_block_stack.1} parent=1 // pred_check_branch
      %30 = sbr.rel (0) target = $region21
    $region20: #{residual_block_stack.1} parent=1 // pred_region
      %31 = dma.done [#allocation4], 4096
    $region21: #{residual_block_stack.1} parent=1 // pred_fallthru
      _
    %p33 = scmp.eq.s32.totalorder 0, 0
    // Predicated region
    $region22: #{residual_block_stack.1} parent=1 // pred_check
      %p34 = pneg %p33
    $region23: #{residual_block_stack.1} parent=1 // pred_check_branch
      %36 = sbr.rel (%p34) target = $region25
    $region24: #{residual_block_stack.1} parent=1 // pred_region
      %v37 = vld [vmem:[#allocation3] sm:$0xff]
      %v38 = vld [vmem:[#allocation3 + $0x8] sm:$0xff]
      %v39 = vld [vmem:[#allocation3 + $0x10] sm:$0xff]
      %v40 = vld [vmem:[#allocation3 + $0x18] sm:$0xff]
      %v41 = vld [vmem:[#allocation3 + $0x20] sm:$0xff]
      %v42 = vld [vmem:[#allocation3 + $0x28] sm:$0xff]
      %v43 = vld [vmem:[#allocation3 + $0x30] sm:$0xff]
      %v44 = vld [vmem:[#allocation3 + $0x38] sm:$0xff]
      %v45 = vld [vmem:[#allocation3 + $0x40] sm:$0xff]
      %v46 = vld [vmem:[#allocation3 + $0x48] sm:$0xff]
      %v47 = vld [vmem:[#allocation3 + $0x50] sm:$0xff]
      %v48 = vld [vmem:[#allocation3 + $0x58] sm:$0xff]
      %v49 = vld [vmem:[#allocation3 + $0x60] sm:$0xff]
      %v50 = vld [vmem:[#allocation3 + $0x68] sm:$0xff]
      %v51 = vld [vmem:[#allocation3 + $0x70] sm:$0xff]
      %v52 = vld [vmem:[#allocation3 + $0x78] sm:$0xff]
      %v53 = vld [vmem:[#allocation3 + $0x80] sm:$0xff]
      %v54 = vld [vmem:[#allocation3 + $0x88] sm:$0xff]
      %v55 = vld [vmem:[#allocation3 + $0x90] sm:$0xff]
      %v56 = vld [vmem:[#allocation3 + $0x98] sm:$0xff]
      %v57 = vld [vmem:[#allocation3 + $0xa0] sm:$0xff]
      %v58 = vld [vmem:[#allocation3 + $0xa8] sm:$0xff]
      %v59 = vld [vmem:[#allocation3 + $0xb0] sm:$0xff]
      %v60 = vld [vmem:[#allocation3 + $0xb8] sm:$0xff]
      %v61 = vld [vmem:[#allocation3 + $0xc0] sm:$0xff]
      %v62 = vld [vmem:[#allocation3 + $0xc8] sm:$0xff]
      %v63 = vld [vmem:[#allocation3 + $0xd0] sm:$0xff]
      %v64 = vld [vmem:[#allocation3 + $0xd8] sm:$0xff]
      %v65 = vld [vmem:[#allocation3 + $0xe0] sm:$0xff]
      %v66 = vld [vmem:[#allocation3 + $0xe8] sm:$0xff]
      %v67 = vld [vmem:[#allocation3 + $0xf0] sm:$0xff]
      %v68 = vld [vmem:[#allocation3 + $0xf8] sm:$0xff]
      %69 = vst [vmem:[#allocation2] sm:$0xff] %v37
      %70 = vst [vmem:[#allocation2 + $0x8] sm:$0xff] %v38
      %71 = vst [vmem:[#allocation2 + $0x10] sm:$0xff] %v39
      %72 = vst [vmem:[#allocation2 + $0x18] sm:$0xff] %v40
      %73 = vst [vmem:[#allocation2 + $0x20] sm:$0xff] %v41
      %74 = vst [vmem:[#allocation2 + $0x28] sm:$0xff] %v42
      %75 = vst [vmem:[#allocation2 + $0x30] sm:$0xff] %v43
      %76 = vst [vmem:[#allocation2 + $0x38] sm:$0xff] %v44
      %77 = vst [vmem:[#allocation2 + $0x40] sm:$0xff] %v45
      %78 = vst [vmem:[#allocation2 + $0x48] sm:$0xff] %v46
      %79 = vst [vmem:[#allocation2 + $0x50] sm:$0xff] %v47
      %80 = vst [vmem:[#allocation2 + $0x58] sm:$0xff] %v48
      %81 = vst [vmem:[#allocation2 + $0x60] sm:$0xff] %v49
      %82 = vst [vmem:[#allocation2 + $0x68] sm:$0xff] %v50
      %83 = vst [vmem:[#allocation2 + $0x70] sm:$0xff] %v51
      %84 = vst [vmem:[#allocation2 + $0x78] sm:$0xff] %v52
      %85 = vst [vmem:[#allocation2 + $0x80] sm:$0xff] %v53
      %86 = vst [vmem:[#allocation2 + $0x88] sm:$0xff] %v54
      %87 = vst [vmem:[#allocation2 + $0x90] sm:$0xff] %v55
      %88 = vst [vmem:[#allocation2 + $0x98] sm:$0xff] %v56
      %89 = vst [vmem:[#allocation2 + $0xa0] sm:$0xff] %v57
      %90 = vst [vmem:[#allocation2 + $0xa8] sm:$0xff] %v58
      %91 = vst [vmem:[#allocation2 + $0xb0] sm:$0xff] %v59
      %92 = vst [vmem:[#allocation2 + $0xb8] sm:$0xff] %v60
      %93 = vst [vmem:[#allocation2 + $0xc0] sm:$0xff] %v61
      %94 = vst [vmem:[#allocation2 + $0xc8] sm:$0xff] %v62
      %95 = vst [vmem:[#allocation2 + $0xd0] sm:$0xff] %v63
      %96 = vst [vmem:[#allocation2 + $0xd8] sm:$0xff] %v64
      %97 = vst [vmem:[#allocation2 + $0xe0] sm:$0xff] %v65
      %98 = vst [vmem:[#allocation2 + $0xe8] sm:$0xff] %v66
      %99 = vst [vmem:[#allocation2 + $0xf0] sm:$0xff] %v67
      %100 = vst [vmem:[#allocation2 + $0xf8] sm:$0xff] %v68
    $region25: #{residual_block_stack.1} parent=1 // pred_fallthru
      _
    %v101 = vld [vmem:[%s3] sm:$0xf]
    %v102 = vld [vmem:[#allocation2] sm:$0xff]
    %v103 = vld [vmem:[#allocation2 + $0x8] sm:$0xff]
    %v104 = vld [vmem:[#allocation2 + $0x10] sm:$0xff]
    %v105 = vld [vmem:[#allocation2 + $0x18] sm:$0xff]
    %v106 = vld [vmem:[#allocation2 + $0x20] sm:$0xff]
    %v107 = vld [vmem:[#allocation2 + $0x28] sm:$0xff]
    %v108 = vld [vmem:[#allocation2 + $0x30] sm:$0xff]
    %v109 = vld [vmem:[#allocation2 + $0x38] sm:$0xff]
    %v110 = vld [vmem:[#allocation2 + $0x40] sm:$0xff]
    %v111 = vld [vmem:[#allocation2 + $0x48] sm:$0xff]
    %v112 = vld [vmem:[#allocation2 + $0x50] sm:$0xff]
    %v113 = vld [vmem:[#allocation2 + $0x58] sm:$0xff]
    %v114 = vld [vmem:[#allocation2 + $0x60] sm:$0xff]
    %v115 = vld [vmem:[#allocation2 + $0x68] sm:$0xff]
    %v116 = vld [vmem:[#allocation2 + $0x70] sm:$0xff]
    %v117 = vld [vmem:[#allocation2 + $0x78] sm:$0xff]
    %v118 = vld [vmem:[#allocation2 + $0x80] sm:$0xff]
    %v119 = vld [vmem:[#allocation2 + $0x88] sm:$0xff]
    %v120 = vld [vmem:[#allocation2 + $0x90] sm:$0xff]
    %v121 = vld [vmem:[#allocation2 + $0x98] sm:$0xff]
    %v122 = vld [vmem:[#allocation2 + $0xa0] sm:$0xff]
    %v123 = vld [vmem:[#allocation2 + $0xa8] sm:$0xff]
    %v124 = vld [vmem:[#allocation2 + $0xb0] sm:$0xff]
    %v125 = vld [vmem:[#allocation2 + $0xb8] sm:$0xff]
    %v126 = vld [vmem:[#allocation2 + $0xc0] sm:$0xff]
    %v127 = vld [vmem:[#allocation2 + $0xc8] sm:$0xff]
    %v128 = vld [vmem:[#allocation2 + $0xd0] sm:$0xff]
    %v129 = vld [vmem:[#allocation2 + $0xd8] sm:$0xff]
    %v130 = vld [vmem:[#allocation2 + $0xe0] sm:$0xff]
    %v131 = vld [vmem:[#allocation2 + $0xe8] sm:$0xff]
    %v132 = vld [vmem:[#allocation2 + $0xf0] sm:$0xff]
    %v133 = vld [vmem:[#allocation2 + $0xf8] sm:$0xff]
    %v134 = vpack.c.bf16 %v103, %v102
    %v135 = vpack.c.bf16 %v105, %v104
    %v136 = vpack.c.bf16 %v107, %v106
    %v137 = vpack.c.bf16 %v109, %v108
    %v138 = vpack.c.bf16 %v111, %v110
    %v139 = vpack.c.bf16 %v113, %v112
    %v140 = vpack.c.bf16 %v115, %v114
    %v141 = vpack.c.bf16 %v117, %v116
    %v142 = vpack.c.bf16 %v119, %v118
    %v143 = vpack.c.bf16 %v121, %v120
    %v144 = vpack.c.bf16 %v123, %v122
    %v145 = vpack.c.bf16 %v125, %v124
    %v146 = vpack.c.bf16 %v127, %v126
    %v147 = vpack.c.bf16 %v129, %v128
    %v148 = vpack.c.bf16 %v131, %v130
    %v149 = vpack.c.bf16 %v133, %v132
    %v150 = vld [vmem:[%s1] sm:$0xf]
    %v151 = vld [vmem:[%s1 + $0x4] sm:$0xf]
    %v152 = vld [vmem:[%s1 + $0x8] sm:$0xf]
    %v153 = vld [vmem:[%s1 + $0xc] sm:$0xf]
    %v154 = vld [vmem:[%s1 + $0x10] sm:$0xf]
    %v155 = vld [vmem:[%s1 + $0x14] sm:$0xf]
    %v156 = vld [vmem:[%s1 + $0x18] sm:$0xf]
    %v157 = vld [vmem:[%s1 + $0x1c] sm:$0xf]
    %v158 = vld [vmem:[%s1 + $0x20] sm:$0xf]
    %v159 = vld [vmem:[%s1 + $0x24] sm:$0xf]
    %v160 = vld [vmem:[%s1 + $0x28] sm:$0xf]
    %v161 = vld [vmem:[%s1 + $0x2c] sm:$0xf]
    %v162 = vld [vmem:[%s1 + $0x30] sm:$0xf]
    %v163 = vld [vmem:[%s1 + $0x34] sm:$0xf]
    %v164 = vld [vmem:[%s1 + $0x38] sm:$0xf]
    %v165 = vld [vmem:[%s1 + $0x3c] sm:$0xf]
    %v182 = vunpack.c.l.b16 %v150
    %v183 = vunpack.c.l.b16 %v151
    %v184 = vunpack.c.l.b16 %v152
    %v185 = vunpack.c.l.b16 %v153
    %v186 = vunpack.c.l.b16 %v154
    %v187 = vunpack.c.l.b16 %v155
    %v188 = vunpack.c.l.b16 %v156
    %v189 = vunpack.c.l.b16 %v157
    %v190 = vunpack.c.l.b16 %v158
    %v191 = vunpack.c.l.b16 %v159
    %v192 = vunpack.c.l.b16 %v160
    %v193 = vunpack.c.l.b16 %v161
    %v194 = vunpack.c.l.b16 %v162
    %v195 = vunpack.c.l.b16 %v163
    %v196 = vunpack.c.l.b16 %v164
    %v197 = vunpack.c.l.b16 %v165
    %v198 = vpack.c.b16 %v183, %v182
    %v199 = vpack.c.b16 %v185, %v184
    %v200 = vpack.c.b16 %v187, %v186
    %v201 = vpack.c.b16 %v189, %v188
    %v202 = vpack.c.b16 %v191, %v190
    %v203 = vpack.c.b16 %v193, %v192
    %v204 = vpack.c.b16 %v195, %v194
    %v205 = vpack.c.b16 %v197, %v196
    %214 = vmatprep.subr.bf16.mxu0 0
    %215 = vmatpush1.bf16.msra.mxu0 %v198
    %216 = vmatprep.subr.bf16.mxu0 0
    %217 = vmatpush1.bf16.msra.mxu0 %v199
    %218 = vmatprep.subr.bf16.mxu0 0
    %219 = vmatpush1.bf16.msra.mxu0 %v200
    %220 = vmatprep.subr.bf16.mxu0 0
    %221 = vmatpush1.bf16.msra.mxu0 %v201
    %222 = vmatprep.subr.bf16.mxu0 0
    %223 = vmatpush1.bf16.msra.mxu0 %v202
    %224 = vmatprep.subr.bf16.mxu0 0
    %225 = vmatpush1.bf16.msra.mxu0 %v203
    %226 = vmatprep.subr.bf16.mxu0 0
    %227 = vmatpush1.bf16.msra.mxu0 %v204
    %228 = vmatprep.subr.bf16.mxu0 0
    %229 = vmatpush1.bf16.msra.mxu0 %v205
    %230 = vmatprep.subr.bf16.mxu0 0
    %231 = vmatpush1.bf16.msra.mxu0 0
    %232 = vmatprep.subr.bf16.mxu0 0
    %233 = vmatpush1.bf16.msra.mxu0 0
    %234 = vmatprep.subr.bf16.mxu0 0
    %235 = vmatpush1.bf16.msra.mxu0 0
    %236 = vmatprep.subr.bf16.mxu0 0
    %237 = vmatpush1.bf16.msra.mxu0 0
    %238 = vmatprep.subr.bf16.mxu0 0
    %239 = vmatpush1.bf16.msra.mxu0 0
    %240 = vmatprep.subr.bf16.mxu0 0
    %241 = vmatpush1.bf16.msra.mxu0 0
    %242 = vmatprep.subr.bf16.mxu0 0
    %243 = vmatpush1.bf16.msra.mxu0 0
    %244 = vmatprep.subr.bf16.mxu0 0
    %245 = vmatpush1.bf16.msra.mxu0 0
    %246 = vmatprep.mubr.bf16.mxu0 0
    %247 = vmatmul.mubr.bf16.gmra.mrb[0].mxu0 %v134
    %v248 = vpop.f32.mrb[0].mxu0
    %v249 = vadd.f32 0.0, %v248
    %v250 = vpop.f32.mrb[0].mxu0
    %v251 = vpop.f32.mrb[0].mxu0
    %v252 = vadd.f32 0.0, %v251
    %v253 = vpop.f32.mrb[0].mxu0
    %254 = vmatprep.mubr.bf16.mxu0 0
    %255 = vmatmul.mubr.bf16.gmra.mrb[0].mxu0 %v135
    %v256 = vpop.f32.mrb[0].mxu0
    %v257 = vadd.f32 0.0, %v256
    %v258 = vpop.f32.mrb[0].mxu0
    %v259 = vpop.f32.mrb[0].mxu0
    %v260 = vadd.f32 0.0, %v259
    %v261 = vpop.f32.mrb[0].mxu0
    %262 = vmatprep.mubr.bf16.mxu0 0
    %263 = vmatmul.mubr.bf16.gmra.mrb[0].mxu0 %v136
    %v264 = vpop.f32.mrb[0].mxu0
    %v265 = vadd.f32 0.0, %v264
    %v266 = vpop.f32.mrb[0].mxu0
    %v267 = vpop.f32.mrb[0].mxu0
    %v268 = vadd.f32 0.0, %v267
    %v269 = vpop.f32.mrb[0].mxu0
    %270 = vmatprep.mubr.bf16.mxu0 0
    %271 = vmatmul.mubr.bf16.gmra.mrb[0].mxu0 %v137
    %v272 = vpop.f32.mrb[0].mxu0
    %v273 = vadd.f32 0.0, %v272
    %v274 = vpop.f32.mrb[0].mxu0
    %v275 = vpop.f32.mrb[0].mxu0
    %v276 = vadd.f32 0.0, %v275
    %v277 = vpop.f32.mrb[0].mxu0
    %278 = vmatprep.mubr.bf16.mxu0 0
    %279 = vmatmul.mubr.bf16.gmra.mrb[0].mxu0 %v138
    %v280 = vpop.f32.mrb[0].mxu0
    %v281 = vadd.f32 0.0, %v280
    %v282 = vpop.f32.mrb[0].mxu0
    %v283 = vpop.f32.mrb[0].mxu0
    %v284 = vadd.f32 0.0, %v283
    %v285 = vpop.f32.mrb[0].mxu0
    %286 = vmatprep.mubr.bf16.mxu0 0
    %287 = vmatmul.mubr.bf16.gmra.mrb[0].mxu0 %v139
    %v288 = vpop.f32.mrb[0].mxu0
    %v289 = vadd.f32 0.0, %v288
    %v290 = vpop.f32.mrb[0].mxu0
    %v291 = vpop.f32.mrb[0].mxu0
    %v292 = vadd.f32 0.0, %v291
    %v293 = vpop.f32.mrb[0].mxu0
    %294 = vmatprep.mubr.bf16.mxu0 0
    %295 = vmatmul.mubr.bf16.gmra.mrb[0].mxu0 %v140
    %v296 = vpop.f32.mrb[0].mxu0
    %v297 = vadd.f32 0.0, %v296
    %v298 = vpop.f32.mrb[0].mxu0
    %v299 = vpop.f32.mrb[0].mxu0
    %v300 = vadd.f32 0.0, %v299
    %v301 = vpop.f32.mrb[0].mxu0
    %302 = vmatprep.mubr.bf16.mxu0 0
    %303 = vmatmul.mubr.bf16.gmra.mrb[0].mxu0 %v141
    %v304 = vpop.f32.mrb[0].mxu0
    %v305 = vadd.f32 0.0, %v304
    %v306 = vpop.f32.mrb[0].mxu0
    %v307 = vpop.f32.mrb[0].mxu0
    %v308 = vadd.f32 0.0, %v307
    %v309 = vpop.f32.mrb[0].mxu0
    %310 = vmatprep.mubr.bf16.mxu0 0
    %311 = vmatmul.mubr.bf16.gmra.mrb[0].mxu0 %v142
    %v312 = vpop.f32.mrb[0].mxu0
    %v313 = vadd.f32 0.0, %v312
    %v314 = vpop.f32.mrb[0].mxu0
    %v315 = vpop.f32.mrb[0].mxu0
    %v316 = vadd.f32 0.0, %v315
    %v317 = vpop.f32.mrb[0].mxu0
    %318 = vmatprep.mubr.bf16.mxu0 0
    %319 = vmatmul.mubr.bf16.gmra.mrb[0].mxu0 %v143
    %v320 = vpop.f32.mrb[0].mxu0
    %v321 = vadd.f32 0.0, %v320
    %v322 = vpop.f32.mrb[0].mxu0
    %v323 = vpop.f32.mrb[0].mxu0
    %v324 = vadd.f32 0.0, %v323
    %v325 = vpop.f32.mrb[0].mxu0
    %326 = vmatprep.mubr.bf16.mxu0 0
    %327 = vmatmul.mubr.bf16.gmra.mrb[0].mxu0 %v144
    %v328 = vpop.f32.mrb[0].mxu0
    %v329 = vadd.f32 0.0, %v328
    %v330 = vpop.f32.mrb[0].mxu0
    %v331 = vpop.f32.mrb[0].mxu0
    %v332 = vadd.f32 0.0, %v331
    %v333 = vpop.f32.mrb[0].mxu0
    %334 = vmatprep.mubr.bf16.mxu0 0
    %335 = vmatmul.mubr.bf16.gmra.mrb[0].mxu0 %v145
    %v336 = vpop.f32.mrb[0].mxu0
    %v337 = vadd.f32 0.0, %v336
    %v338 = vpop.f32.mrb[0].mxu0
    %v339 = vpop.f32.mrb[0].mxu0
    %v340 = vadd.f32 0.0, %v339
    %v341 = vpop.f32.mrb[0].mxu0
    %342 = vmatprep.mubr.bf16.mxu0 0
    %343 = vmatmul.mubr.bf16.gmra.mrb[0].mxu0 %v146
    %v344 = vpop.f32.mrb[0].mxu0
    %v345 = vadd.f32 0.0, %v344
    %v346 = vpop.f32.mrb[0].mxu0
    %v347 = vpop.f32.mrb[0].mxu0
    %v348 = vadd.f32 0.0, %v347
    %v349 = vpop.f32.mrb[0].mxu0
    %350 = vmatprep.mubr.bf16.mxu0 0
    %351 = vmatmul.mubr.bf16.gmra.mrb[0].mxu0 %v147
    %v352 = vpop.f32.mrb[0].mxu0
    %v353 = vadd.f32 0.0, %v352
    %v354 = vpop.f32.mrb[0].mxu0
    %v355 = vpop.f32.mrb[0].mxu0
    %v356 = vadd.f32 0.0, %v355
    %v357 = vpop.f32.mrb[0].mxu0
    %358 = vmatprep.mubr.bf16.mxu0 0
    %359 = vmatmul.mubr.bf16.gmra.mrb[0].mxu0 %v148
    %v360 = vpop.f32.mrb[0].mxu0
    %v361 = vadd.f32 0.0, %v360
    %v362 = vpop.f32.mrb[0].mxu0
    %v363 = vpop.f32.mrb[0].mxu0
    %v364 = vadd.f32 0.0, %v363
    %v365 = vpop.f32.mrb[0].mxu0
    %366 = vmatprep.mubr.bf16.mxu0 0
    %367 = vmatmul.mubr.bf16.gmra.mrb[0].mxu0 %v149
    %v368 = vpop.f32.mrb[0].mxu0
    %v369 = vadd.f32 0.0, %v368
    %v370 = vpop.f32.mrb[0].mxu0
    %v371 = vpop.f32.mrb[0].mxu0
    %v372 = vadd.f32 0.0, %v371
    %v373 = vpop.f32.mrb[0].mxu0
    %374 = vdwg.mxu0
    %v375 = vadd.f32 %v249, %v252
    %v376 = vadd.f32 %v375, %v257
    %v377 = vadd.f32 %v376, %v260
    %v378 = vadd.f32 %v377, %v265
    %v379 = vadd.f32 %v378, %v268
    %v380 = vadd.f32 %v379, %v273
    %v381 = vadd.f32 %v380, %v276
    %v382 = vadd.f32 %v381, %v281
    %v383 = vadd.f32 %v382, %v284
    %v384 = vadd.f32 %v383, %v289
    %v385 = vadd.f32 %v384, %v292
    %v386 = vadd.f32 %v385, %v297
    %v387 = vadd.f32 %v386, %v300
    %v388 = vadd.f32 %v387, %v305
    %v389 = vadd.f32 %v388, %v308
    %v390 = vadd.f32 %v389, %v313
    %v391 = vadd.f32 %v390, %v316
    %v392 = vadd.f32 %v391, %v321
    %v393 = vadd.f32 %v392, %v324
    %v394 = vadd.f32 %v393, %v329
    %v395 = vadd.f32 %v394, %v332
    %v396 = vadd.f32 %v395, %v337
    %v397 = vadd.f32 %v396, %v340
    %v398 = vadd.f32 %v397, %v345
    %v399 = vadd.f32 %v398, %v348
    %v400 = vadd.f32 %v399, %v353
    %v401 = vadd.f32 %v400, %v356
    %v402 = vadd.f32 %v401, %v361
    %v403 = vadd.f32 %v402, %v364
    %v404 = vadd.f32 %v403, %v369
    %v405 = vadd.f32 %v404, %v372
    %v406 = vrot.slane %v405, 4
    %v407 = vadd.f32 %v405, %v406
    %v408 = vrot.slane %v407, 2
    %v409 = vadd.f32 %v407, %v408
    %v410 = vrot.slane %v409, 1
    %v411 = vadd.f32 %v409, %v410
    %v412 = vrcp.pop 256.0
    %v413 = vmul.f32 %v411, %v412
    %v414 = vsub.f32 %v249, %v413
    %v415 = vsub.f32 %v252, %v413
    %v416 = vsub.f32 %v257, %v413
    %v417 = vsub.f32 %v260, %v413
    %v418 = vsub.f32 %v265, %v413
    %v419 = vsub.f32 %v268, %v413
    %v420 = vsub.f32 %v273, %v413
    %v421 = vsub.f32 %v276, %v413
    %v422 = vsub.f32 %v281, %v413
    %v423 = vsub.f32 %v284, %v413
    %v424 = vsub.f32 %v289, %v413
    %v425 = vsub.f32 %v292, %v413
    %v426 = vsub.f32 %v297, %v413
    %v427 = vsub.f32 %v300, %v413
    %v428 = vsub.f32 %v305, %v413
    %v429 = vsub.f32 %v308, %v413
    %v430 = vsub.f32 %v313, %v413
    %v431 = vsub.f32 %v316, %v413
    %v432 = vsub.f32 %v321, %v413
    %v433 = vsub.f32 %v324, %v413
    %v434 = vsub.f32 %v329, %v413
    %v435 = vsub.f32 %v332, %v413
    %v436 = vsub.f32 %v337, %v413
    %v437 = vsub.f32 %v340, %v413
    %v438 = vsub.f32 %v345, %v413
    %v439 = vsub.f32 %v348, %v413
    %v440 = vsub.f32 %v353, %v413
    %v441 = vsub.f32 %v356, %v413
    %v442 = vsub.f32 %v361, %v413
    %v443 = vsub.f32 %v364, %v413
    %v444 = vsub.f32 %v369, %v413
    %v445 = vsub.f32 %v372, %v413
    %v446 = vmul.f32 %v414, %v414
    %v447 = vmul.f32 %v415, %v415
    %v448 = vmul.f32 %v416, %v416
    %v449 = vmul.f32 %v417, %v417
    %v450 = vmul.f32 %v418, %v418
    %v451 = vmul.f32 %v419, %v419
    %v452 = vmul.f32 %v420, %v420
    %v453 = vmul.f32 %v421, %v421
    %v454 = vmul.f32 %v422, %v422
    %v455 = vmul.f32 %v423, %v423
    %v456 = vmul.f32 %v424, %v424
    %v457 = vmul.f32 %v425, %v425
    %v458 = vmul.f32 %v426, %v426
    %v459 = vmul.f32 %v427, %v427
    %v460 = vmul.f32 %v428, %v428
    %v461 = vmul.f32 %v429, %v429
    %v462 = vmul.f32 %v430, %v430
    %v463 = vmul.f32 %v431, %v431
    %v464 = vmul.f32 %v432, %v432
    %v465 = vmul.f32 %v433, %v433
    %v466 = vmul.f32 %v434, %v434
    %v467 = vmul.f32 %v435, %v435
    %v468 = vmul.f32 %v436, %v436
    %v469 = vmul.f32 %v437, %v437
    %v470 = vmul.f32 %v438, %v438
    %v471 = vmul.f32 %v439, %v439
    %v472 = vmul.f32 %v440, %v440
    %v473 = vmul.f32 %v441, %v441
    %v474 = vmul.f32 %v442, %v442
    %v475 = vmul.f32 %v443, %v443
    %v476 = vmul.f32 %v444, %v444
    %v477 = vmul.f32 %v445, %v445
    %v478 = vadd.f32 %v446, %v447
    %v479 = vadd.f32 %v478, %v448
    %v480 = vadd.f32 %v479, %v449
    %v481 = vadd.f32 %v480, %v450
    %v482 = vadd.f32 %v481, %v451
    %v483 = vadd.f32 %v482, %v452
    %v484 = vadd.f32 %v483, %v453
    %v485 = vadd.f32 %v484, %v454
    %v486 = vadd.f32 %v485, %v455
    %v487 = vadd.f32 %v486, %v456
    %v488 = vadd.f32 %v487, %v457
    %v489 = vadd.f32 %v488, %v458
    %v490 = vadd.f32 %v489, %v459
    %v491 = vadd.f32 %v490, %v460
    %v492 = vadd.f32 %v491, %v461
    %v493 = vadd.f32 %v492, %v462
    %v494 = vadd.f32 %v493, %v463
    %v495 = vadd.f32 %v494, %v464
    %v496 = vadd.f32 %v495, %v465
    %v497 = vadd.f32 %v496, %v466
    %v498 = vadd.f32 %v497, %v467
    %v499 = vadd.f32 %v498, %v468
    %v500 = vadd.f32 %v499, %v469
    %v501 = vadd.f32 %v500, %v470
    %v502 = vadd.f32 %v501, %v471
    %v503 = vadd.f32 %v502, %v472
    %v504 = vadd.f32 %v503, %v473
    %v505 = vadd.f32 %v504, %v474
    %v506 = vadd.f32 %v505, %v475
    %v507 = vadd.f32 %v506, %v476
    %v508 = vadd.f32 %v507, %v477
    %v509 = vrot.slane %v508, 4
    %v510 = vadd.f32 %v508, %v509
    %v511 = vrot.slane %v510, 2
    %v512 = vadd.f32 %v510, %v511
    %v513 = vrot.slane %v512, 1
    %v514 = vadd.f32 %v512, %v513
    %v515 = vmul.f32 %v514, %v412
    %v516 = vadd.f32 %v515, 1e-05
    %v517 = vrsqrt.pop %v516
    %v518 = vmul.f32 %v101, %v517
    %v519 = vlaneseq
    %v520 = vshrl.u32 %v519, 7
    %v521 = vsub.s32 0, %v520
    %v522 = vrot.slane %v518, %v521
    %v523 = vmul.f32 %v414, %v522
    %v524 = vmul.f32 %v415, %v522
    %v525 = vmul.f32 %v416, %v522
    %v526 = vmul.f32 %v417, %v522
    %v527 = vmul.f32 %v418, %v522
    %v528 = vmul.f32 %v419, %v522
    %v529 = vmul.f32 %v420, %v522
    %v530 = vmul.f32 %v421, %v522
    %v531 = vmul.f32 %v422, %v522
    %v532 = vmul.f32 %v423, %v522
    %v533 = vmul.f32 %v424, %v522
    %v534 = vmul.f32 %v425, %v522
    %v535 = vmul.f32 %v426, %v522
    %v536 = vmul.f32 %v427, %v522
    %v537 = vmul.f32 %v428, %v522
    %v538 = vmul.f32 %v429, %v522
    %v539 = vmul.f32 %v430, %v522
    %v540 = vmul.f32 %v431, %v522
    %v541 = vmul.f32 %v432, %v522
    %v542 = vmul.f32 %v433, %v522
    %v543 = vmul.f32 %v434, %v522
    %v544 = vmul.f32 %v435, %v522
    %v545 = vmul.f32 %v436, %v522
    %v546 = vmul.f32 %v437, %v522
    %v547 = vmul.f32 %v438, %v522
    %v548 = vmul.f32 %v439, %v522
    %v549 = vmul.f32 %v440, %v522
    %v550 = vmul.f32 %v441, %v522
    %v551 = vmul.f32 %v442, %v522
    %v552 = vmul.f32 %v443, %v522
    %v553 = vmul.f32 %v444, %v522
    %v554 = vmul.f32 %v445, %v522
    %v555 = vlaneseq
    %v556 = vshrl.u32 %v555, 7
    %v557 = vsub.s32 1, %v556
    %v558 = vrot.slane %v101, %v557
    %v559 = vadd.f32 %v523, %v558
    %v560 = vadd.f32 %v524, %v558
    %v561 = vadd.f32 %v525, %v558
    %v562 = vadd.f32 %v526, %v558
    %v563 = vadd.f32 %v527, %v558
    %v564 = vadd.f32 %v528, %v558
    %v565 = vadd.f32 %v529, %v558
    %v566 = vadd.f32 %v530, %v558
    %v567 = vadd.f32 %v531, %v558
    %v568 = vadd.f32 %v532, %v558
    %v569 = vadd.f32 %v533, %v558
    %v570 = vadd.f32 %v534, %v558
    %v571 = vadd.f32 %v535, %v558
    %v572 = vadd.f32 %v536, %v558
    %v573 = vadd.f32 %v537, %v558
    %v574 = vadd.f32 %v538, %v558
    %v575 = vadd.f32 %v539, %v558
    %v576 = vadd.f32 %v540, %v558
    %v577 = vadd.f32 %v541, %v558
    %v578 = vadd.f32 %v542, %v558
    %v579 = vadd.f32 %v543, %v558
    %v580 = vadd.f32 %v544, %v558
    %v581 = vadd.f32 %v545, %v558
    %v582 = vadd.f32 %v546, %v558
    %v583 = vadd.f32 %v547, %v558
    %v584 = vadd.f32 %v548, %v558
    %v585 = vadd.f32 %v549, %v558
    %v586 = vadd.f32 %v550, %v558
    %v587 = vadd.f32 %v551, %v558
    %v588 = vadd.f32 %v552, %v558
    %v589 = vadd.f32 %v553, %v558
    %v590 = vadd.f32 %v554, %v558
    %v591 = vmax.f32 %v559, 0.0
    %v592 = vmax.f32 %v560, 0.0
    %v593 = vmax.f32 %v561, 0.0
    %v594 = vmax.f32 %v562, 0.0
    %v595 = vmax.f32 %v563, 0.0
    %v596 = vmax.f32 %v564, 0.0
    %v597 = vmax.f32 %v565, 0.0
    %v598 = vmax.f32 %v566, 0.0
    %v599 = vmax.f32 %v567, 0.0
    %v600 = vmax.f32 %v568, 0.0
    %v601 = vmax.f32 %v569, 0.0
    %v602 = vmax.f32 %v570, 0.0
    %v603 = vmax.f32 %v571, 0.0
    %v604 = vmax.f32 %v572, 0.0
    %v605 = vmax.f32 %v573, 0.0
    %v606 = vmax.f32 %v574, 0.0
    %v607 = vmax.f32 %v575, 0.0
    %v608 = vmax.f32 %v576, 0.0
    %v609 = vmax.f32 %v577, 0.0
    %v610 = vmax.f32 %v578, 0.0
    %v611 = vmax.f32 %v579, 0.0
    %v612 = vmax.f32 %v580, 0.0
    %v613 = vmax.f32 %v581, 0.0
    %v614 = vmax.f32 %v582, 0.0
    %v615 = vmax.f32 %v583, 0.0
    %v616 = vmax.f32 %v584, 0.0
    %v617 = vmax.f32 %v585, 0.0
    %v618 = vmax.f32 %v586, 0.0
    %v619 = vmax.f32 %v587, 0.0
    %v620 = vmax.f32 %v588, 0.0
    %v621 = vmax.f32 %v589, 0.0
    %v622 = vmax.f32 %v590, 0.0
    %v623 = vpack.c.bf16 %v592, %v591
    %v624 = vpack.c.bf16 %v594, %v593
    %v625 = vpack.c.bf16 %v596, %v595
    %v626 = vpack.c.bf16 %v598, %v597
    %v627 = vpack.c.bf16 %v600, %v599
    %v628 = vpack.c.bf16 %v602, %v601
    %v629 = vpack.c.bf16 %v604, %v603
    %v630 = vpack.c.bf16 %v606, %v605
    %v631 = vpack.c.bf16 %v608, %v607
    %v632 = vpack.c.bf16 %v610, %v609
    %v633 = vpack.c.bf16 %v612, %v611
    %v634 = vpack.c.bf16 %v614, %v613
    %v635 = vpack.c.bf16 %v616, %v615
    %v636 = vpack.c.bf16 %v618, %v617
    %v637 = vpack.c.bf16 %v620, %v619
    %v638 = vpack.c.bf16 %v622, %v621
    %v639 = vld [vmem:[%s2] sm:$0xf]
    %v640 = vld [vmem:[%s2 + $0x4] sm:$0xf]
    %v641 = vld [vmem:[%s2 + $0x8] sm:$0xf]
    %v642 = vld [vmem:[%s2 + $0xc] sm:$0xf]
    %v643 = vld [vmem:[%s2 + $0x10] sm:$0xf]
    %v644 = vld [vmem:[%s2 + $0x14] sm:$0xf]
    %v645 = vld [vmem:[%s2 + $0x18] sm:$0xf]
    %v646 = vld [vmem:[%s2 + $0x1c] sm:$0xf]
    %v647 = vld [vmem:[%s2 + $0x20] sm:$0xf]
    %v648 = vld [vmem:[%s2 + $0x24] sm:$0xf]
    %v649 = vld [vmem:[%s2 + $0x28] sm:$0xf]
    %v650 = vld [vmem:[%s2 + $0x2c] sm:$0xf]
    %v651 = vld [vmem:[%s2 + $0x30] sm:$0xf]
    %v652 = vld [vmem:[%s2 + $0x34] sm:$0xf]
    %v653 = vld [vmem:[%s2 + $0x38] sm:$0xf]
    %v654 = vld [vmem:[%s2 + $0x3c] sm:$0xf]
    %v671 = vunpack.c.l.b16 %v639
    %v672 = vunpack.c.l.b16 %v640
    %v673 = vunpack.c.l.b16 %v641
    %v674 = vunpack.c.l.b16 %v642
    %v675 = vunpack.c.l.b16 %v643
    %v676 = vunpack.c.l.b16 %v644
    %v677 = vunpack.c.l.b16 %v645
    %v678 = vunpack.c.l.b16 %v646
    %v679 = vunpack.c.l.b16 %v647
    %v680 = vunpack.c.l.b16 %v648
    %v681 = vunpack.c.l.b16 %v649
    %v682 = vunpack.c.l.b16 %v650
    %v683 = vunpack.c.l.b16 %v651
    %v684 = vunpack.c.l.b16 %v652
    %v685 = vunpack.c.l.b16 %v653
    %v686 = vunpack.c.l.b16 %v654
    %v687 = vpack.c.b16 %v672, %v671
    %v688 = vpack.c.b16 %v674, %v673
    %v689 = vpack.c.b16 %v676, %v675
    %v690 = vpack.c.b16 %v678, %v677
    %v691 = vpack.c.b16 %v680, %v679
    %v692 = vpack.c.b16 %v682, %v681
    %v693 = vpack.c.b16 %v684, %v683
    %v694 = vpack.c.b16 %v686, %v685
    %703 = vmatprep.subr.bf16.mxu0 0
    %704 = vmatpush1.bf16.msra.mxu0 %v687
    %705 = vmatprep.subr.bf16.mxu0 0
    %706 = vmatpush1.bf16.msra.mxu0 %v688
    %707 = vmatprep.subr.bf16.mxu0 0
    %708 = vmatpush1.bf16.msra.mxu0 %v689
    %709 = vmatprep.subr.bf16.mxu0 0
    %710 = vmatpush1.bf16.msra.mxu0 %v690
    %711 = vmatprep.subr.bf16.mxu0 0
    %712 = vmatpush1.bf16.msra.mxu0 %v691
    %713 = vmatprep.subr.bf16.mxu0 0
    %714 = vmatpush1.bf16.msra.mxu0 %v692
    %715 = vmatprep.subr.bf16.mxu0 0
    %716 = vmatpush1.bf16.msra.mxu0 %v693
    %717 = vmatprep.subr.bf16.mxu0 0
    %718 = vmatpush1.bf16.msra.mxu0 %v694
    %719 = vmatprep.subr.bf16.mxu0 0
    %720 = vmatpush1.bf16.msra.mxu0 0
    %721 = vmatprep.subr.bf16.mxu0 0
    %722 = vmatpush1.bf16.msra.mxu0 0
    %723 = vmatprep.subr.bf16.mxu0 0
    %724 = vmatpush1.bf16.msra.mxu0 0
    %725 = vmatprep.subr.bf16.mxu0 0
    %726 = vmatpush1.bf16.msra.mxu0 0
    %727 = vmatprep.subr.bf16.mxu0 0
    %728 = vmatpush1.bf16.msra.mxu0 0
    %729 = vmatprep.subr.bf16.mxu0 0
    %730 = vmatpush1.bf16.msra.mxu0 0
    %731 = vmatprep.subr.bf16.mxu0 0
    %732 = vmatpush1.bf16.msra.mxu0 0
    %733 = vmatprep.subr.bf16.mxu0 0
    %734 = vmatpush1.bf16.msra.mxu0 0
    %735 = vmatprep.mubr.bf16.mxu0 0
    %736 = vmatmul.mubr.bf16.gmra.mrb[0].mxu0 %v623
    %v737 = vpop.f32.mrb[0].mxu0
    %v738 = vadd.f32 0.0, %v737
    %v739 = vpop.f32.mrb[0].mxu0
    %v740 = vpop.f32.mrb[0].mxu0
    %v741 = vadd.f32 0.0, %v740
    %v742 = vpop.f32.mrb[0].mxu0
    %743 = vmatprep.mubr.bf16.mxu0 0
    %744 = vmatmul.mubr.bf16.gmra.mrb[0].mxu0 %v624
    %v745 = vpop.f32.mrb[0].mxu0
    %v746 = vadd.f32 0.0, %v745
    %v747 = vpop.f32.mrb[0].mxu0
    %v748 = vpop.f32.mrb[0].mxu0
    %v749 = vadd.f32 0.0, %v748
    %v750 = vpop.f32.mrb[0].mxu0
    %751 = vmatprep.mubr.bf16.mxu0 0
    %752 = vmatmul.mubr.bf16.gmra.mrb[0].mxu0 %v625
    %v753 = vpop.f32.mrb[0].mxu0
    %v754 = vadd.f32 0.0, %v753
    %v755 = vpop.f32.mrb[0].mxu0
    %v756 = vpop.f32.mrb[0].mxu0
    %v757 = vadd.f32 0.0, %v756
    %v758 = vpop.f32.mrb[0].mxu0
    %759 = vmatprep.mubr.bf16.mxu0 0
    %760 = vmatmul.mubr.bf16.gmra.mrb[0].mxu0 %v626
    %v761 = vpop.f32.mrb[0].mxu0
    %v762 = vadd.f32 0.0, %v761
    %v763 = vpop.f32.mrb[0].mxu0
    %v764 = vpop.f32.mrb[0].mxu0
    %v765 = vadd.f32 0.0, %v764
    %v766 = vpop.f32.mrb[0].mxu0
    %767 = vmatprep.mubr.bf16.mxu0 0
    %768 = vmatmul.mubr.bf16.gmra.mrb[0].mxu0 %v627
    %v769 = vpop.f32.mrb[0].mxu0
    %v770 = vadd.f32 0.0, %v769
    %v771 = vpop.f32.mrb[0].mxu0
    %v772 = vpop.f32.mrb[0].mxu0
    %v773 = vadd.f32 0.0, %v772
    %v774 = vpop.f32.mrb[0].mxu0
    %775 = vmatprep.mubr.bf16.mxu0 0
    %776 = vmatmul.mubr.bf16.gmra.mrb[0].mxu0 %v628
    %v777 = vpop.f32.mrb[0].mxu0
    %v778 = vadd.f32 0.0, %v777
    %v779 = vpop.f32.mrb[0].mxu0
    %v780 = vpop.f32.mrb[0].mxu0
    %v781 = vadd.f32 0.0, %v780
    %v782 = vpop.f32.mrb[0].mxu0
    %783 = vmatprep.mubr.bf16.mxu0 0
    %784 = vmatmul.mubr.bf16.gmra.mrb[0].mxu0 %v629
    %v785 = vpop.f32.mrb[0].mxu0
    %v786 = vadd.f32 0.0, %v785
    %v787 = vpop.f32.mrb[0].mxu0
    %v788 = vpop.f32.mrb[0].mxu0
    %v789 = vadd.f32 0.0, %v788
    %v790 = vpop.f32.mrb[0].mxu0
    %791 = vmatprep.mubr.bf16.mxu0 0
    %792 = vmatmul.mubr.bf16.gmra.mrb[0].mxu0 %v630
    %v793 = vpop.f32.mrb[0].mxu0
    %v794 = vadd.f32 0.0, %v793
    %v795 = vpop.f32.mrb[0].mxu0
    %v796 = vpop.f32.mrb[0].mxu0
    %v797 = vadd.f32 0.0, %v796
    %v798 = vpop.f32.mrb[0].mxu0
    %799 = vmatprep.mubr.bf16.mxu0 0
    %800 = vmatmul.mubr.bf16.gmra.mrb[0].mxu0 %v631
    %v801 = vpop.f32.mrb[0].mxu0
    %v802 = vadd.f32 0.0, %v801
    %v803 = vpop.f32.mrb[0].mxu0
    %v804 = vpop.f32.mrb[0].mxu0
    %v805 = vadd.f32 0.0, %v804
    %v806 = vpop.f32.mrb[0].mxu0
    %807 = vmatprep.mubr.bf16.mxu0 0
    %808 = vmatmul.mubr.bf16.gmra.mrb[0].mxu0 %v632
    %v809 = vpop.f32.mrb[0].mxu0
    %v810 = vadd.f32 0.0, %v809
    %v811 = vpop.f32.mrb[0].mxu0
    %v812 = vpop.f32.mrb[0].mxu0
    %v813 = vadd.f32 0.0, %v812
    %v814 = vpop.f32.mrb[0].mxu0
    %815 = vmatprep.mubr.bf16.mxu0 0
    %816 = vmatmul.mubr.bf16.gmra.mrb[0].mxu0 %v633
    %v817 = vpop.f32.mrb[0].mxu0
    %v818 = vadd.f32 0.0, %v817
    %v819 = vpop.f32.mrb[0].mxu0
    %v820 = vpop.f32.mrb[0].mxu0
    %v821 = vadd.f32 0.0, %v820
    %v822 = vpop.f32.mrb[0].mxu0
    %823 = vmatprep.mubr.bf16.mxu0 0
    %824 = vmatmul.mubr.bf16.gmra.mrb[0].mxu0 %v634
    %v825 = vpop.f32.mrb[0].mxu0
    %v826 = vadd.f32 0.0, %v825
    %v827 = vpop.f32.mrb[0].mxu0
    %v828 = vpop.f32.mrb[0].mxu0
    %v829 = vadd.f32 0.0, %v828
    %v830 = vpop.f32.mrb[0].mxu0
    %831 = vmatprep.mubr.bf16.mxu0 0
    %832 = vmatmul.mubr.bf16.gmra.mrb[0].mxu0 %v635
    %v833 = vpop.f32.mrb[0].mxu0
    %v834 = vadd.f32 0.0, %v833
    %v835 = vpop.f32.mrb[0].mxu0
    %v836 = vpop.f32.mrb[0].mxu0
    %v837 = vadd.f32 0.0, %v836
    %v838 = vpop.f32.mrb[0].mxu0
    %839 = vmatprep.mubr.bf16.mxu0 0
    %840 = vmatmul.mubr.bf16.gmra.mrb[0].mxu0 %v636
    %v841 = vpop.f32.mrb[0].mxu0
    %v842 = vadd.f32 0.0, %v841
    %v843 = vpop.f32.mrb[0].mxu0
    %v844 = vpop.f32.mrb[0].mxu0
    %v845 = vadd.f32 0.0, %v844
    %v846 = vpop.f32.mrb[0].mxu0
    %847 = vmatprep.mubr.bf16.mxu0 0
    %848 = vmatmul.mubr.bf16.gmra.mrb[0].mxu0 %v637
    %v849 = vpop.f32.mrb[0].mxu0
    %v850 = vadd.f32 0.0, %v849
    %v851 = vpop.f32.mrb[0].mxu0
    %v852 = vpop.f32.mrb[0].mxu0
    %v853 = vadd.f32 0.0, %v852
    %v854 = vpop.f32.mrb[0].mxu0
    %855 = vmatprep.mubr.bf16.mxu0 0
    %856 = vmatmul.mubr.bf16.gmra.mrb[0].mxu0 %v638
    %v857 = vpop.f32.mrb[0].mxu0
    %v858 = vadd.f32 0.0, %v857
    %v859 = vpop.f32.mrb[0].mxu0
    %v860 = vpop.f32.mrb[0].mxu0
    %v861 = vadd.f32 0.0, %v860
    %v862 = vpop.f32.mrb[0].mxu0
    %863 = vdwg.mxu0
    %v864 = vadd.f32 %v738, %v741
    %v865 = vadd.f32 %v864, %v746
    %v866 = vadd.f32 %v865, %v749
    %v867 = vadd.f32 %v866, %v754
    %v868 = vadd.f32 %v867, %v757
    %v869 = vadd.f32 %v868, %v762
    %v870 = vadd.f32 %v869, %v765
    %v871 = vadd.f32 %v870, %v770
    %v872 = vadd.f32 %v871, %v773
    %v873 = vadd.f32 %v872, %v778
    %v874 = vadd.f32 %v873, %v781
    %v875 = vadd.f32 %v874, %v786
    %v876 = vadd.f32 %v875, %v789
    %v877 = vadd.f32 %v876, %v794
    %v878 = vadd.f32 %v877, %v797
    %v879 = vadd.f32 %v878, %v802
    %v880 = vadd.f32 %v879, %v805
    %v881 = vadd.f32 %v880, %v810
    %v882 = vadd.f32 %v881, %v813
    %v883 = vadd.f32 %v882, %v818
    %v884 = vadd.f32 %v883, %v821
    %v885 = vadd.f32 %v884, %v826
    %v886 = vadd.f32 %v885, %v829
    %v887 = vadd.f32 %v886, %v834
    %v888 = vadd.f32 %v887, %v837
    %v889 = vadd.f32 %v888, %v842
    %v890 = vadd.f32 %v889, %v845
    %v891 = vadd.f32 %v890, %v850
    %v892 = vadd.f32 %v891, %v853
    %v893 = vadd.f32 %v892, %v858
    %v894 = vadd.f32 %v893, %v861
    %v895 = vrot.slane %v894, 4
    %v896 = vadd.f32 %v894, %v895
    %v897 = vrot.slane %v896, 2
    %v898 = vadd.f32 %v896, %v897
    %v899 = vrot.slane %v898, 1
    %v900 = vadd.f32 %v898, %v899
    %v901 = vmul.f32 %v900, %v412
    %v902 = vsub.f32 %v738, %v901
    %v903 = vsub.f32 %v741, %v901
    %v904 = vsub.f32 %v746, %v901
    %v905 = vsub.f32 %v749, %v901
    %v906 = vsub.f32 %v754, %v901
    %v907 = vsub.f32 %v757, %v901
    %v908 = vsub.f32 %v762, %v901
    %v909 = vsub.f32 %v765, %v901
    %v910 = vsub.f32 %v770, %v901
    %v911 = vsub.f32 %v773, %v901
    %v912 = vsub.f32 %v778, %v901
    %v913 = vsub.f32 %v781, %v901
    %v914 = vsub.f32 %v786, %v901
    %v915 = vsub.f32 %v789, %v901
    %v916 = vsub.f32 %v794, %v901
    %v917 = vsub.f32 %v797, %v901
    %v918 = vsub.f32 %v802, %v901
    %v919 = vsub.f32 %v805, %v901
    %v920 = vsub.f32 %v810, %v901
    %v921 = vsub.f32 %v813, %v901
    %v922 = vsub.f32 %v818, %v901
    %v923 = vsub.f32 %v821, %v901
    %v924 = vsub.f32 %v826, %v901
    %v925 = vsub.f32 %v829, %v901
    %v926 = vsub.f32 %v834, %v901
    %v927 = vsub.f32 %v837, %v901
    %v928 = vsub.f32 %v842, %v901
    %v929 = vsub.f32 %v845, %v901
    %v930 = vsub.f32 %v850, %v901
    %v931 = vsub.f32 %v853, %v901
    %v932 = vsub.f32 %v858, %v901
    %v933 = vsub.f32 %v861, %v901
    %v934 = vmul.f32 %v902, %v902
    %v935 = vmul.f32 %v903, %v903
    %v936 = vmul.f32 %v904, %v904
    %v937 = vmul.f32 %v905, %v905
    %v938 = vmul.f32 %v906, %v906
    %v939 = vmul.f32 %v907, %v907
    %v940 = vmul.f32 %v908, %v908
    %v941 = vmul.f32 %v909, %v909
    %v942 = vmul.f32 %v910, %v910
    %v943 = vmul.f32 %v911, %v911
    %v944 = vmul.f32 %v912, %v912
    %v945 = vmul.f32 %v913, %v913
    %v946 = vmul.f32 %v914, %v914
    %v947 = vmul.f32 %v915, %v915
    %v948 = vmul.f32 %v916, %v916
    %v949 = vmul.f32 %v917, %v917
    %v950 = vmul.f32 %v918, %v918
    %v951 = vmul.f32 %v919, %v919
    %v952 = vmul.f32 %v920, %v920
    %v953 = vmul.f32 %v921, %v921
    %v954 = vmul.f32 %v922, %v922
    %v955 = vmul.f32 %v923, %v923
    %v956 = vmul.f32 %v924, %v924
    %v957 = vmul.f32 %v925, %v925
    %v958 = vmul.f32 %v926, %v926
    %v959 = vmul.f32 %v927, %v927
    %v960 = vmul.f32 %v928, %v928
    %v961 = vmul.f32 %v929, %v929
    %v962 = vmul.f32 %v930, %v930
    %v963 = vmul.f32 %v931, %v931
    %v964 = vmul.f32 %v932, %v932
    %v965 = vmul.f32 %v933, %v933
    %v966 = vadd.f32 %v934, %v935
    %v967 = vadd.f32 %v966, %v936
    %v968 = vadd.f32 %v967, %v937
    %v969 = vadd.f32 %v968, %v938
    %v970 = vadd.f32 %v969, %v939
    %v971 = vadd.f32 %v970, %v940
    %v972 = vadd.f32 %v971, %v941
    %v973 = vadd.f32 %v972, %v942
    %v974 = vadd.f32 %v973, %v943
    %v975 = vadd.f32 %v974, %v944
    %v976 = vadd.f32 %v975, %v945
    %v977 = vadd.f32 %v976, %v946
    %v978 = vadd.f32 %v977, %v947
    %v979 = vadd.f32 %v978, %v948
    %v980 = vadd.f32 %v979, %v949
    %v981 = vadd.f32 %v980, %v950
    %v982 = vadd.f32 %v981, %v951
    %v983 = vadd.f32 %v982, %v952
    %v984 = vadd.f32 %v983, %v953
    %v985 = vadd.f32 %v984, %v954
    %v986 = vadd.f32 %v985, %v955
    %v987 = vadd.f32 %v986, %v956
    %v988 = vadd.f32 %v987, %v957
    %v989 = vadd.f32 %v988, %v958
    %v990 = vadd.f32 %v989, %v959
    %v991 = vadd.f32 %v990, %v960
    %v992 = vadd.f32 %v991, %v961
    %v993 = vadd.f32 %v992, %v962
    %v994 = vadd.f32 %v993, %v963
    %v995 = vadd.f32 %v994, %v964
    %v996 = vadd.f32 %v995, %v965
    %v997 = vrot.slane %v996, 4
    %v998 = vadd.f32 %v996, %v997
    %v999 = vrot.slane %v998, 2
    %v1000 = vadd.f32 %v998, %v999
    %v1001 = vrot.slane %v1000, 1
    %v1002 = vadd.f32 %v1000, %v1001
    %v1003 = vmul.f32 %v1002, %v412
    %v1004 = vadd.f32 %v1003, 1e-05
    %v1005 = vrsqrt.pop %v1004
    %v1006 = vmul.f32 %v101, %v1005
    %v1007 = vlaneseq
    %v1008 = vshrl.u32 %v1007, 7
    %v1009 = vsub.s32 2, %v1008
    %v1010 = vrot.slane %v1006, %v1009
    %v1011 = vmul.f32 %v902, %v1010
    %v1012 = vmul.f32 %v903, %v1010
    %v1013 = vmul.f32 %v904, %v1010
    %v1014 = vmul.f32 %v905, %v1010
    %v1015 = vmul.f32 %v906, %v1010
    %v1016 = vmul.f32 %v907, %v1010
    %v1017 = vmul.f32 %v908, %v1010
    %v1018 = vmul.f32 %v909, %v1010
    %v1019 = vmul.f32 %v910, %v1010
    %v1020 = vmul.f32 %v911, %v1010
    %v1021 = vmul.f32 %v912, %v1010
    %v1022 = vmul.f32 %v913, %v1010
    %v1023 = vmul.f32 %v914, %v1010
    %v1024 = vmul.f32 %v915, %v1010
    %v1025 = vmul.f32 %v916, %v1010
    %v1026 = vmul.f32 %v917, %v1010
    %v1027 = vmul.f32 %v918, %v1010
    %v1028 = vmul.f32 %v919, %v1010
    %v1029 = vmul.f32 %v920, %v1010
    %v1030 = vmul.f32 %v921, %v1010
    %v1031 = vmul.f32 %v922, %v1010
    %v1032 = vmul.f32 %v923, %v1010
    %v1033 = vmul.f32 %v924, %v1010
    %v1034 = vmul.f32 %v925, %v1010
    %v1035 = vmul.f32 %v926, %v1010
    %v1036 = vmul.f32 %v927, %v1010
    %v1037 = vmul.f32 %v928, %v1010
    %v1038 = vmul.f32 %v929, %v1010
    %v1039 = vmul.f32 %v930, %v1010
    %v1040 = vmul.f32 %v931, %v1010
    %v1041 = vmul.f32 %v932, %v1010
    %v1042 = vmul.f32 %v933, %v1010
    %v1043 = vlaneseq
    %v1044 = vshrl.u32 %v1043, 7
    %v1045 = vsub.s32 3, %v1044
    %v1046 = vrot.slane %v101, %v1045
    %v1047 = vadd.f32 %v1011, %v1046
    %v1048 = vadd.f32 %v1012, %v1046
    %v1049 = vadd.f32 %v1013, %v1046
    %v1050 = vadd.f32 %v1014, %v1046
    %v1051 = vadd.f32 %v1015, %v1046
    %v1052 = vadd.f32 %v1016, %v1046
    %v1053 = vadd.f32 %v1017, %v1046
    %v1054 = vadd.f32 %v1018, %v1046
    %v1055 = vadd.f32 %v1019, %v1046
    %v1056 = vadd.f32 %v1020, %v1046
    %v1057 = vadd.f32 %v1021, %v1046
    %v1058 = vadd.f32 %v1022, %v1046
    %v1059 = vadd.f32 %v1023, %v1046
    %v1060 = vadd.f32 %v1024, %v1046
    %v1061 = vadd.f32 %v1025, %v1046
    %v1062 = vadd.f32 %v1026, %v1046
    %v1063 = vadd.f32 %v1027, %v1046
    %v1064 = vadd.f32 %v1028, %v1046
    %v1065 = vadd.f32 %v1029, %v1046
    %v1066 = vadd.f32 %v1030, %v1046
    %v1067 = vadd.f32 %v1031, %v1046
    %v1068 = vadd.f32 %v1032, %v1046
    %v1069 = vadd.f32 %v1033, %v1046
    %v1070 = vadd.f32 %v1034, %v1046
    %v1071 = vadd.f32 %v1035, %v1046
    %v1072 = vadd.f32 %v1036, %v1046
    %v1073 = vadd.f32 %v1037, %v1046
    %v1074 = vadd.f32 %v1038, %v1046
    %v1075 = vadd.f32 %v1039, %v1046
    %v1076 = vadd.f32 %v1040, %v1046
    %v1077 = vadd.f32 %v1041, %v1046
    %v1078 = vadd.f32 %v1042, %v1046
    %v1079 = vadd.f32 %v1047, %v102
    %v1080 = vadd.f32 %v1048, %v103
    %v1081 = vadd.f32 %v1049, %v104
    %v1082 = vadd.f32 %v1050, %v105
    %v1083 = vadd.f32 %v1051, %v106
    %v1084 = vadd.f32 %v1052, %v107
    %v1085 = vadd.f32 %v1053, %v108
    %v1086 = vadd.f32 %v1054, %v109
    %v1087 = vadd.f32 %v1055, %v110
    %v1088 = vadd.f32 %v1056, %v111
    %v1089 = vadd.f32 %v1057, %v112
    %v1090 = vadd.f32 %v1058, %v113
    %v1091 = vadd.f32 %v1059, %v114
    %v1092 = vadd.f32 %v1060, %v115
    %v1093 = vadd.f32 %v1061, %v116
    %v1094 = vadd.f32 %v1062, %v117
    %v1095 = vadd.f32 %v1063, %v118
    %v1096 = vadd.f32 %v1064, %v119
    %v1097 = vadd.f32 %v1065, %v120
    %v1098 = vadd.f32 %v1066, %v121
    %v1099 = vadd.f32 %v1067, %v122
    %v1100 = vadd.f32 %v1068, %v123
    %v1101 = vadd.f32 %v1069, %v124
    %v1102 = vadd.f32 %v1070, %v125
    %v1103 = vadd.f32 %v1071, %v126
    %v1104 = vadd.f32 %v1072, %v127
    %v1105 = vadd.f32 %v1073, %v128
    %v1106 = vadd.f32 %v1074, %v129
    %v1107 = vadd.f32 %v1075, %v130
    %v1108 = vadd.f32 %v1076, %v131
    %v1109 = vadd.f32 %v1077, %v132
    %v1110 = vadd.f32 %v1078, %v133
    %v1111 = vmax.f32 %v1079, 0.0
    %v1112 = vmax.f32 %v1080, 0.0
    %v1113 = vmax.f32 %v1081, 0.0
    %v1114 = vmax.f32 %v1082, 0.0
    %v1115 = vmax.f32 %v1083, 0.0
    %v1116 = vmax.f32 %v1084, 0.0
    %v1117 = vmax.f32 %v1085, 0.0
    %v1118 = vmax.f32 %v1086, 0.0
    %v1119 = vmax.f32 %v1087, 0.0
    %v1120 = vmax.f32 %v1088, 0.0
    %v1121 = vmax.f32 %v1089, 0.0
    %v1122 = vmax.f32 %v1090, 0.0
    %v1123 = vmax.f32 %v1091, 0.0
    %v1124 = vmax.f32 %v1092, 0.0
    %v1125 = vmax.f32 %v1093, 0.0
    %v1126 = vmax.f32 %v1094, 0.0
    %v1127 = vmax.f32 %v1095, 0.0
    %v1128 = vmax.f32 %v1096, 0.0
    %v1129 = vmax.f32 %v1097, 0.0
    %v1130 = vmax.f32 %v1098, 0.0
    %v1131 = vmax.f32 %v1099, 0.0
    %v1132 = vmax.f32 %v1100, 0.0
    %v1133 = vmax.f32 %v1101, 0.0
    %v1134 = vmax.f32 %v1102, 0.0
    %v1135 = vmax.f32 %v1103, 0.0
    %v1136 = vmax.f32 %v1104, 0.0
    %v1137 = vmax.f32 %v1105, 0.0
    %v1138 = vmax.f32 %v1106, 0.0
    %v1139 = vmax.f32 %v1107, 0.0
    %v1140 = vmax.f32 %v1108, 0.0
    %v1141 = vmax.f32 %v1109, 0.0
    %v1142 = vmax.f32 %v1110, 0.0
    %1143 = vst [vmem:[#allocation2] sm:$0xff] %v1111
    %1144 = vst [vmem:[#allocation2 + $0x8] sm:$0xff] %v1112
    %1145 = vst [vmem:[#allocation2 + $0x10] sm:$0xff] %v1113
    %1146 = vst [vmem:[#allocation2 + $0x18] sm:$0xff] %v1114
    %1147 = vst [vmem:[#allocation2 + $0x20] sm:$0xff] %v1115
    %1148 = vst [vmem:[#allocation2 + $0x28] sm:$0xff] %v1116
    %1149 = vst [vmem:[#allocation2 + $0x30] sm:$0xff] %v1117
    %1150 = vst [vmem:[#allocation2 + $0x38] sm:$0xff] %v1118
    %1151 = vst [vmem:[#allocation2 + $0x40] sm:$0xff] %v1119
    %1152 = vst [vmem:[#allocation2 + $0x48] sm:$0xff] %v1120
    %1153 = vst [vmem:[#allocation2 + $0x50] sm:$0xff] %v1121
    %1154 = vst [vmem:[#allocation2 + $0x58] sm:$0xff] %v1122
    %1155 = vst [vmem:[#allocation2 + $0x60] sm:$0xff] %v1123
    %1156 = vst [vmem:[#allocation2 + $0x68] sm:$0xff] %v1124
    %1157 = vst [vmem:[#allocation2 + $0x70] sm:$0xff] %v1125
    %1158 = vst [vmem:[#allocation2 + $0x78] sm:$0xff] %v1126
    %1159 = vst [vmem:[#allocation2 + $0x80] sm:$0xff] %v1127
    %1160 = vst [vmem:[#allocation2 + $0x88] sm:$0xff] %v1128
    %1161 = vst [vmem:[#allocation2 + $0x90] sm:$0xff] %v1129
    %1162 = vst [vmem:[#allocation2 + $0x98] sm:$0xff] %v1130
    %1163 = vst [vmem:[#allocation2 + $0xa0] sm:$0xff] %v1131
    %1164 = vst [vmem:[#allocation2 + $0xa8] sm:$0xff] %v1132
    %1165 = vst [vmem:[#allocation2 + $0xb0] sm:$0xff] %v1133
    %1166 = vst [vmem:[#allocation2 + $0xb8] sm:$0xff] %v1134
    %1167 = vst [vmem:[#allocation2 + $0xc0] sm:$0xff] %v1135
    %1168 = vst [vmem:[#allocation2 + $0xc8] sm:$0xff] %v1136
    %1169 = vst [vmem:[#allocation2 + $0xd0] sm:$0xff] %v1137
    %1170 = vst [vmem:[#allocation2 + $0xd8] sm:$0xff] %v1138
    %1171 = vst [vmem:[#allocation2 + $0xe0] sm:$0xff] %v1139
    %1172 = vst [vmem:[#allocation2 + $0xe8] sm:$0xff] %v1140
    %1173 = vst [vmem:[#allocation2 + $0xf0] sm:$0xff] %v1141
    %1174 = vst [vmem:[#allocation2 + $0xf8] sm:$0xff] %v1142
    // Predicated region
    $region26: #{residual_block_stack.1} parent=1 // pred_check
      %p1175 = pneg %p33
    $region27: #{residual_block_stack.1} parent=1 // pred_check_branch
      %1177 = sbr.rel (%p1175) target = $region29
    $region28: #{residual_block_stack.1} parent=1 // pred_region
      %v1178 = vld [vmem:[#allocation2] sm:$0xff]
      %v1179 = vld [vmem:[#allocation2 + $0x8] sm:$0xff]
      %v1180 = vld [vmem:[#allocation2 + $0x10] sm:$0xff]
      %v1181 = vld [vmem:[#allocation2 + $0x18] sm:$0xff]
      %v1182 = vld [vmem:[#allocation2 + $0x20] sm:$0xff]
      %v1183 = vld [vmem:[#allocation2 + $0x28] sm:$0xff]
      %v1184 = vld [vmem:[#allocation2 + $0x30] sm:$0xff]
      %v1185 = vld [vmem:[#allocation2 + $0x38] sm:$0xff]
      %v1186 = vld [vmem:[#allocation2 + $0x40] sm:$0xff]
      %v1187 = vld [vmem:[#allocation2 + $0x48] sm:$0xff]
      %v1188 = vld [vmem:[#allocation2 + $0x50] sm:$0xff]
      %v1189 = vld [vmem:[#allocation2 + $0x58] sm:$0xff]
      %v1190 = vld [vmem:[#allocation2 + $0x60] sm:$0xff]
      %v1191 = vld [vmem:[#allocation2 + $0x68] sm:$0xff]
      %v1192 = vld [vmem:[#allocation2 + $0x70] sm:$0xff]
      %v1193 = vld [vmem:[#allocation2 + $0x78] sm:$0xff]
      %v1194 = vld [vmem:[#allocation2 + $0x80] sm:$0xff]
      %v1195 = vld [vmem:[#allocation2 + $0x88] sm:$0xff]
      %v1196 = vld [vmem:[#allocation2 + $0x90] sm:$0xff]
      %v1197 = vld [vmem:[#allocation2 + $0x98] sm:$0xff]
      %v1198 = vld [vmem:[#allocation2 + $0xa0] sm:$0xff]
      %v1199 = vld [vmem:[#allocation2 + $0xa8] sm:$0xff]
      %v1200 = vld [vmem:[#allocation2 + $0xb0] sm:$0xff]
      %v1201 = vld [vmem:[#allocation2 + $0xb8] sm:$0xff]
      %v1202 = vld [vmem:[#allocation2 + $0xc0] sm:$0xff]
      %v1203 = vld [vmem:[#allocation2 + $0xc8] sm:$0xff]
      %v1204 = vld [vmem:[#allocation2 + $0xd0] sm:$0xff]
      %v1205 = vld [vmem:[#allocation2 + $0xd8] sm:$0xff]
      %v1206 = vld [vmem:[#allocation2 + $0xe0] sm:$0xff]
      %v1207 = vld [vmem:[#allocation2 + $0xe8] sm:$0xff]
      %v1208 = vld [vmem:[#allocation2 + $0xf0] sm:$0xff]
      %v1209 = vld [vmem:[#allocation2 + $0xf8] sm:$0xff]
      %1210 = vst [vmem:[#allocation6] sm:$0xff] %v1178
      %1211 = vst [vmem:[#allocation6 + $0x8] sm:$0xff] %v1179
      %1212 = vst [vmem:[#allocation6 + $0x10] sm:$0xff] %v1180
      %1213 = vst [vmem:[#allocation6 + $0x18] sm:$0xff] %v1181
      %1214 = vst [vmem:[#allocation6 + $0x20] sm:$0xff] %v1182
      %1215 = vst [vmem:[#allocation6 + $0x28] sm:$0xff] %v1183
      %1216 = vst [vmem:[#allocation6 + $0x30] sm:$0xff] %v1184
      %1217 = vst [vmem:[#allocation6 + $0x38] sm:$0xff] %v1185
      %1218 = vst [vmem:[#allocation6 + $0x40] sm:$0xff] %v1186
      %1219 = vst [vmem:[#allocation6 + $0x48] sm:$0xff] %v1187
      %1220 = vst [vmem:[#allocation6 + $0x50] sm:$0xff] %v1188
      %1221 = vst [vmem:[#allocation6 + $0x58] sm:$0xff] %v1189
      %1222 = vst [vmem:[#allocation6 + $0x60] sm:$0xff] %v1190
      %1223 = vst [vmem:[#allocation6 + $0x68] sm:$0xff] %v1191
      %1224 = vst [vmem:[#allocation6 + $0x70] sm:$0xff] %v1192
      %1225 = vst [vmem:[#allocation6 + $0x78] sm:$0xff] %v1193
      %1226 = vst [vmem:[#allocation6 + $0x80] sm:$0xff] %v1194
      %1227 = vst [vmem:[#allocation6 + $0x88] sm:$0xff] %v1195
      %1228 = vst [vmem:[#allocation6 + $0x90] sm:$0xff] %v1196
      %1229 = vst [vmem:[#allocation6 + $0x98] sm:$0xff] %v1197
      %1230 = vst [vmem:[#allocation6 + $0xa0] sm:$0xff] %v1198
      %1231 = vst [vmem:[#allocation6 + $0xa8] sm:$0xff] %v1199
      %1232 = vst [vmem:[#allocation6 + $0xb0] sm:$0xff] %v1200
      %1233 = vst [vmem:[#allocation6 + $0xb8] sm:$0xff] %v1201
      %1234 = vst [vmem:[#allocation6 + $0xc0] sm:$0xff] %v1202
      %1235 = vst [vmem:[#allocation6 + $0xc8] sm:$0xff] %v1203
      %1236 = vst [vmem:[#allocation6 + $0xd0] sm:$0xff] %v1204
      %1237 = vst [vmem:[#allocation6 + $0xd8] sm:$0xff] %v1205
      %1238 = vst [vmem:[#allocation6 + $0xe0] sm:$0xff] %v1206
      %1239 = vst [vmem:[#allocation6 + $0xe8] sm:$0xff] %v1207
      %1240 = vst [vmem:[#allocation6 + $0xf0] sm:$0xff] %v1208
      %1241 = vst [vmem:[#allocation6 + $0xf8] sm:$0xff] %v1209
    $region29: #{residual_block_stack.1} parent=1 // pred_fallthru
      _
    // Predicated region
    $region30: #{residual_block_stack.1} parent=1 // pred_check
      _
    $region31: #{residual_block_stack.1} parent=1 // pred_check_branch
      %1243 = sbr.rel (0) target = $region33
    $region32: #{residual_block_stack.1} parent=1 // pred_region
      %s1245 = ssub.s32 4096, 4096
      %1246 = vsyncadd [#allocation5], %s1245
      %s1247 = sshll.u32 [#allocation6], 4
      %s1248 = int_to_ptr.vmem [resolvable:$true] %s1247
      %1253 = dma.vmem_to_hbm [thread:$0]  %s1248, 4096, %s4, [#allocation5], 128, 128, 8
    $region33: #{residual_block_stack.1} parent=1 // pred_fallthru
      _
    // Predicated region
    $region34: #{residual_block_stack.1} parent=1 // pred_check
      _
    $region35: #{residual_block_stack.1} parent=1 // pred_check_branch
      %1255 = sbr.rel (0) target = $region37
    $region36: #{residual_block_stack.1} parent=1 // pred_region
      %1256 = dma.done [#allocation5], 4096
    $region37: #{residual_block_stack.1} parent=1 // pred_fallthru
      _
    %1257 = vsyncpa [#allocation4], 1
    %1258 = vsyncpa [#allocation5], 1

</llo_original>
